<compile_context>
chip_gen: v5e
topology: v5e:2x2
jax: 0.10.0
libtpu: 0.0.40
codegen_flags: <defaults>
</compile_context>

<pallas_src>
import functools

import jax
import jax.numpy as jnp
import numpy as np
from jax.experimental import pallas as pl
from jax.experimental.pallas import tpu as pltpu


def _round_up(x, m):
    return ((x + m - 1) // m) * m


def nnet_kernel(x_ref, w1_ref, b1_ref, w2_ref, b2_ref, w3_ref, b3_ref, o_ref):
    # Layer 1: Linear(F -> H) + ReLU   (MXU matmul, f32 accumulation)
    h1 = jnp.dot(x_ref[...], w1_ref[...], preferred_element_type=jnp.float32)
    h1 = jnp.maximum(h1 + b1_ref[...], 0.0)          # f32 elementwise (VPU)
    # Dropout(p) is identity at inference time.
    # Layer 2: Linear(H -> H) + ReLU
    h1 = h1.astype(w2_ref.dtype)                      # feed MXU in compute dtype
    h2 = jnp.dot(h1, w2_ref[...], preferred_element_type=jnp.float32)
    h2 = jnp.maximum(h2 + b2_ref[...], 0.0)
    # Layer 3: Linear(H -> 1) as VPU multiply + XLU lane-reduce
    # (a (TILE_N,H)x(H,1) matmul would waste 127/128 MXU output columns).
    out = jnp.sum(h2 * w3_ref[...], axis=-1, keepdims=True)
    o_ref[...] = out + b3_ref[0, 0]                   # b3 scalar from SMEM


def nnet_forward(x, prepared_params, *, tile_n=512):
    """x: (N, F) float32.  Returns (N,) float32 (like .flatten())."""
    w1, b1, w2, b2, w3_row, b3 = prepared_params
    N, F = x.shape
    F_pad, H_pad = w1.shape
    compute_dtype = w1.dtype

    # Batch tile: multiple of 16 (covers packed bf16 sublane tiling), capped
    # by the (rounded-up) batch so tiny test batches stay one small step.
    tile_n = max(16, min(_round_up(tile_n, 16), _round_up(N, 16)))
    N_pad = _round_up(N, tile_n)

    # Pad x once per call: rows to N_pad, features to the 128-lane width.
    x_p = jnp.zeros((N_pad, F_pad), compute_dtype)
    x_p = x_p.at[:N, :F].set(x.astype(compute_dtype))

    grid = (N_pad // tile_n,)

    itemsize = jnp.dtype(compute_dtype).itemsize
    flops = 2 * N_pad * (F_pad * H_pad + H_pad * H_pad + H_pad)
    bytes_accessed = (
        N_pad * F_pad * itemsize                      # x
        + (F_pad * H_pad + H_pad * H_pad) * itemsize  # w1, w2
        + (3 * H_pad + 1) * 4                         # b1, b2, w3_row, b3 (f32)
        + N_pad * 4                                   # output
    )

    out = pl.pallas_call(
        nnet_kernel,
        out_shape=jax.ShapeDtypeStruct((N_pad, 1), jnp.float32),
        grid=grid,
        in_specs=[
            pl.BlockSpec((tile_n, F_pad), lambda i: (i, 0)),   # x: tiled over batch
            pl.BlockSpec((F_pad, H_pad), lambda i: (0, 0)),    # w1: VMEM-resident
            pl.BlockSpec((1, H_pad), lambda i: (0, 0)),        # b1
            pl.BlockSpec((H_pad, H_pad), lambda i: (0, 0)),    # w2
            pl.BlockSpec((1, H_pad), lambda i: (0, 0)),        # b2
            pl.BlockSpec((1, H_pad), lambda i: (0, 0)),        # w3 as a row
            pl.BlockSpec(memory_space=pltpu.MemorySpace.SMEM), # b3 scalar
        ],
        out_specs=pl.BlockSpec((tile_n, 1), lambda i: (i, 0)),
        compiler_params=pltpu.CompilerParams(
            dimension_semantics=("parallel",),
            vmem_limit_bytes=32 * 1024 * 1024,
        ),
        cost_estimate=pl.CostEstimate(
            flops=int(flops), transcendentals=0, bytes_accessed=int(bytes_accessed)
        ),
    )(x_p, w1, b1, w2, b2, w3_row, b3)

    return out[:N, 0]  # .flatten() over the real batch rows


# ----------------------------------------------------------------------------
# Parameter construction / preparation
# ----------------------------------------------------------------------------

def orthogonal_init(key, shape):
    """Deterministic orthogonal init (mirrors nn.init.orthogonal_ semantics)."""
    rows, cols = shape
    n = max(rows, cols)
    a = jax.random.normal(key, (n, n), dtype=jnp.float32)
    q, r = jnp.linalg.qr(a)
    q = q * jnp.sign(jnp.diag(r))[None, :]
    return q[:rows, :cols]


def init_nnet_params(key, num_features, num_hidden):
    """Raw (unpadded, f32) parameters, stored as (in, out) for x @ W."""
    k1, k2, k3 = jax.random.split(key, 3)
    # PyTorch Linear weight is (out, in); we store the transpose (in, out).
    w1 = orthogonal_init(k1, (num_hidden, num_features)).T   # (F, H)
    w2 = orthogonal_init(k2, (num_hidden, num_hidden)).T     # (H, H)
    w3 = orthogonal_init(k3, (1, num_hidden)).T              # (H, 1)
    b1 = jnp.zeros((1, num_hidden), jnp.float32)
    b2 = jnp.zeros((1, num_hidden), jnp.float32)
    b3 = jnp.zeros((1, 1), jnp.float32)
    return (w1, b1, w2, b2, w3, b3)


def prepare_nnet_params(params, compute_dtype=jnp.float32, lane=128):
    """Zero-pad F/H to the 128-lane width (done once), cast matmul weights to
    the compute dtype; biases and the final-layer row stay f32."""
    w1, b1, w2, b2, w3, b3 = params
    F, H = w1.shape
    F_pad, H_pad = _round_up(F, lane), _round_up(H, lane)

    w1_p = jnp.zeros((F_pad, H_pad), compute_dtype).at[:F, :H].set(
        w1.astype(compute_dtype))
    w2_p = jnp.zeros((H_pad, H_pad), compute_dtype).at[:H, :H].set(
        w2.astype(compute_dtype))
    b1_p = jnp.zeros((1, H_pad), jnp.float32).at[:, :H].set(b1)
    b2_p = jnp.zeros((1, H_pad), jnp.float32).at[:, :H].set(b2)
    w3_row = jnp.zeros((1, H_pad), jnp.float32).at[0, :H].set(w3[:, 0])
    b3_p = b3.astype(jnp.float32)                    # (1, 1) scalar, SMEM
    return (w1_p, b1_p, w2_p, b2_p, w3_row, b3_p)


def nnet_reference(x, params):
    """Pure-JAX f32 reference for correctness checks."""
    w1, b1, w2, b2, w3, b3 = params
    h1 = jnp.maximum(x @ w1 + b1, 0.0)
    h2 = jnp.maximum(h1 @ w2 + b2, 0.0)
    return (h2 @ w3 + b3).reshape(-1)


if __name__ == "__main__":
    key = jax.random.PRNGKey(0)
    k_x, k_x2, k_p = jax.random.split(key, 3)

    num_features = 16
    num_hidden = 32
    params = init_nnet_params(k_p, num_features, num_hidden)

    # --- small batch, f32 compute (tight check) ------------------------------
    batch = 8
    x = jax.random.normal(k_x, (batch, num_features), dtype=jnp.float32)
    prep_f32 = prepare_nnet_params(params, compute_dtype=jnp.float32)
    y = jax.block_until_ready(nnet_forward(x, prep_f32))
    y_ref = nnet_reference(x, params)
    np.testing.assert_allclose(np.asarray(y), np.asarray(y_ref),
                               rtol=1e-4, atol=1e-4)
    assert y.shape == (batch,)

    # --- larger batch, multi-step grid, f32 ----------------------------------
    batch2 = 300
    x2 = jax.random.normal(k_x2, (batch2, num_features), dtype=jnp.float32)
    y2 = jax.block_until_ready(nnet_forward(x2, prep_f32, tile_n=128))
    y2_ref = nnet_reference(x2, params)
    np.testing.assert_allclose(np.asarray(y2), np.asarray(y2_ref),
                               rtol=1e-4, atol=1e-4)
    assert y2.shape == (batch2,)

    # --- larger batch, bf16 compute (v6e/v7x bandwidth path), looser tol -----
    prep_bf16 = prepare_nnet_params(params, compute_dtype=jnp.bfloat16)
    y3 = jax.block_until_ready(nnet_forward(x2, prep_bf16, tile_n=128))
    np.testing.assert_allclose(np.asarray(y3), np.asarray(y2_ref),
                               rtol=3e-2, atol=3e-2)

    print("KERNEL_OK")
</pallas_src>

<mosaic_0001>
module attributes {stable_mosaic.version = 11 : i64} {
  func.func @nnet_kernel(%arg0: i32, %arg1: memref<16x128xf32, #tpu.memory_space<vmem>>, %arg2: memref<128x128xf32, #tpu.memory_space<vmem>>, %arg3: memref<1x128xf32, #tpu.memory_space<vmem>>, %arg4: memref<128x128xf32, #tpu.memory_space<vmem>>, %arg5: memref<1x128xf32, #tpu.memory_space<vmem>>, %arg6: memref<1x128xf32, #tpu.memory_space<vmem>>, %arg7: memref<1x1xf32, #tpu.memory_space<smem>>, %arg8: memref<16x1xf32, #tpu.memory_space<vmem>>) attributes {dimension_semantics = [#tpu.dimension_semantics<parallel>], iteration_bounds = array<i64: 1>, scalar_prefetch = 0 : i64, scratch_operands = 0 : i64, tpu.core_type = #tpu.core_type<tc>, window_params = [{transform_indices = @transform_0, window_bounds = array<i64: 16, 128>}, {pipeline_mode = #tpu.pipeline_mode<synchronous>, transform_indices = @transform_1, window_bounds = array<i64: 128, 128>}, {pipeline_mode = #tpu.pipeline_mode<synchronous>, transform_indices = @transform_2, window_bounds = array<i64: 1, 128>}, {pipeline_mode = #tpu.pipeline_mode<synchronous>, transform_indices = @transform_3, window_bounds = array<i64: 128, 128>}, {pipeline_mode = #tpu.pipeline_mode<synchronous>, transform_indices = @transform_4, window_bounds = array<i64: 1, 128>}, {pipeline_mode = #tpu.pipeline_mode<synchronous>, transform_indices = @transform_5, window_bounds = array<i64: 1, 128>}, {transform_indices = @transform_6, window_bounds = array<i64: 1, 1>}, {transform_indices = @transform_7, window_bounds = array<i64: 16, 1>}]} {
    %c0 = arith.constant 0 : index
    %c0_0 = arith.constant 0 : index
    %0 = vector.load %arg1[%c0, %c0_0] : memref<16x128xf32, #tpu.memory_space<vmem>>, vector<16x128xf32>
    %c0_1 = arith.constant 0 : index
    %c0_2 = arith.constant 0 : index
    %1 = vector.load %arg2[%c0_1, %c0_2] : memref<128x128xf32, #tpu.memory_space<vmem>>, vector<128x128xf32>
    %cst = arith.constant dense<0.000000e+00> : vector<16x128xf32>
    %2 = tpu.matmul %0, %1, %cst {dimension_numbers = #tpu.dot_dimension_numbers<[1], [0], [0], [1], [0, 0, 1, 1], [], []>} : vector<16x128xf32>, vector<128x128xf32>, vector<16x128xf32> -> vector<16x128xf32>
    %c0_3 = arith.constant 0 : index
    %c0_4 = arith.constant 0 : index
    %3 = vector.load %arg3[%c0_3, %c0_4] : memref<1x128xf32, #tpu.memory_space<vmem>>, vector<1x128xf32>
    %4 = vector.broadcast %3 : vector<1x128xf32> to vector<16x128xf32>
    %5 = arith.addf %2, %4 : vector<16x128xf32>
    %cst_5 = arith.constant 0.000000e+00 : f32
    %6 = vector.broadcast %cst_5 : f32 to vector<16x128xf32>
    %7 = arith.maximumf %5, %6 : vector<16x128xf32>
    %c0_6 = arith.constant 0 : index
    %c0_7 = arith.constant 0 : index
    %8 = vector.load %arg4[%c0_6, %c0_7] : memref<128x128xf32, #tpu.memory_space<vmem>>, vector<128x128xf32>
    %cst_8 = arith.constant dense<0.000000e+00> : vector<16x128xf32>
    %9 = tpu.matmul %7, %8, %cst_8 {dimension_numbers = #tpu.dot_dimension_numbers<[1], [0], [0], [1], [0, 0, 1, 1], [], []>} : vector<16x128xf32>, vector<128x128xf32>, vector<16x128xf32> -> vector<16x128xf32>
    %c0_9 = arith.constant 0 : index
    %c0_10 = arith.constant 0 : index
    %10 = vector.load %arg5[%c0_9, %c0_10] : memref<1x128xf32, #tpu.memory_space<vmem>>, vector<1x128xf32>
    %11 = vector.broadcast %10 : vector<1x128xf32> to vector<16x128xf32>
    %12 = arith.addf %9, %11 : vector<16x128xf32>
    %cst_11 = arith.constant 0.000000e+00 : f32
    %13 = vector.broadcast %cst_11 : f32 to vector<16x128xf32>
    %14 = arith.maximumf %12, %13 : vector<16x128xf32>
    %c0_12 = arith.constant 0 : index
    %c0_13 = arith.constant 0 : index
    %15 = vector.load %arg6[%c0_12, %c0_13] : memref<1x128xf32, #tpu.memory_space<vmem>>, vector<1x128xf32>
    %16 = vector.broadcast %15 : vector<1x128xf32> to vector<16x128xf32>
    %17 = arith.mulf %14, %16 : vector<16x128xf32>
    %cst_14 = arith.constant dense<0.000000e+00> : vector<16xf32>
    %18 = vector.multi_reduction <add>, %17, %cst_14 [1] : vector<16x128xf32> to vector<16xf32>
    %19 = vector.shape_cast %18 : vector<16xf32> to vector<16x1xf32>
    %c0_15 = arith.constant 0 : index
    %c0_16 = arith.constant 0 : index
    %20 = memref.load %arg7[%c0_15, %c0_16] : memref<1x1xf32, #tpu.memory_space<smem>>
    %21 = vector.broadcast %20 : f32 to vector<16x1xf32>
    %22 = arith.addf %19, %21 : vector<16x1xf32>
    %c0_17 = arith.constant 0 : index
    %c0_18 = arith.constant 0 : index
    %23 = vector.load %arg8[%c0_17, %c0_18] : memref<16x1xf32, #tpu.memory_space<vmem>>, vector<16x1xf32>
    tpu.vector_store %arg8[%c0_17, %c0_18], %22 {strides = array<i32>} : memref<16x1xf32, #tpu.memory_space<vmem>>, vector<16x1xf32>,
    return
  }
  func.func @transform_0(%arg0: i32) -> (i32, i32) {
    %c0_i32 = arith.constant 0 : i32
    %c0_i32_0 = arith.constant 0 : i32
    return %arg0, %c0_i32 : i32, i32
  }
  func.func @transform_1(%arg0: i32) -> (i32, i32) {
    %c0_i32 = arith.constant 0 : i32
    %c0_i32_0 = arith.constant 0 : i32
    %c0_i32_1 = arith.constant 0 : i32
    return %c0_i32, %c0_i32_0 : i32, i32
  }
  func.func @transform_2(%arg0: i32) -> (i32, i32) {
    %c0_i32 = arith.constant 0 : i32
    %c0_i32_0 = arith.constant 0 : i32
    %c0_i32_1 = arith.constant 0 : i32
    return %c0_i32, %c0_i32_0 : i32, i32
  }
  func.func @transform_3(%arg0: i32) -> (i32, i32) {
    %c0_i32 = arith.constant 0 : i32
    %c0_i32_0 = arith.constant 0 : i32
    %c0_i32_1 = arith.constant 0 : i32
    return %c0_i32, %c0_i32_0 : i32, i32
  }
  func.func @transform_4(%arg0: i32) -> (i32, i32) {
    %c0_i32 = arith.constant 0 : i32
    %c0_i32_0 = arith.constant 0 : i32
    %c0_i32_1 = arith.constant 0 : i32
    return %c0_i32, %c0_i32_0 : i32, i32
  }
  func.func @transform_5(%arg0: i32) -> (i32, i32) {
    %c0_i32 = arith.constant 0 : i32
    %c0_i32_0 = arith.constant 0 : i32
    %c0_i32_1 = arith.constant 0 : i32
    return %c0_i32, %c0_i32_0 : i32, i32
  }
  func.func @transform_6(%arg0: i32) -> (i32, i32) {
    %c0_i32 = arith.constant 0 : i32
    %c0_i32_0 = arith.constant 0 : i32
    %c0_i32_1 = arith.constant 0 : i32
    return %c0_i32, %c0_i32_0 : i32, i32
  }
  func.func @transform_7(%arg0: i32) -> (i32, i32) {
    %c0_i32 = arith.constant 0 : i32
    %c0_i32_0 = arith.constant 0 : i32
    return %arg0, %c0_i32 : i32, i32
  }
}

</mosaic_0001>

<llo_original>
// kernel: tpu_custom_call.1
$region0: #{tpu_custom_call.1}
  #allocation0 [shape = 'u32[]', space=smem, size = 0x4, offset = 0x4, fixed_abs, tag = 'smem constant byte address 0x4 - core index']
  #allocation1 [shape = 'u32[72,128]{1,0:T(1,128)}', space=vmem, size = 0x9000, scoped, tag = 'internal scratch']
  #allocation2 [shape = 'f32[1,1]{1,0:T(1,128)S(6)}', space=smem, size = 0x200, scoped, tag = 'scoped memory for tpu_custom_call.1']
  %s0 = inlined_call_operand.hbm [shape: f32[16,128], index: 0, kind: input, shape index: {}]
  %s1 = inlined_call_operand.hbm [shape: f32[128,128], index: 1, kind: input, shape index: {}]
  %s2 = inlined_call_operand.vmem [shape: f32[1,128], index: 2, kind: input, shape index: {}]
  %s3 = inlined_call_operand.hbm [shape: f32[128,128], index: 3, kind: input, shape index: {}]
  %s4 = inlined_call_operand.vmem [shape: f32[1,128], index: 4, kind: input, shape index: {}]
  %s5 = inlined_call_operand.vmem [shape: f32[1,128], index: 5, kind: input, shape index: {}]
  %s6 = inlined_call_operand.<no memory space> [shape: f32[1,1], index: 6, kind: input, shape index: {}]
  %s7 = inlined_call_operand.vmem [shape: f32[16,1], index: 7, kind: output, shape index: {}]
  %s8 = sld [smem:[#allocation0]]
  $region50: #{tpu_custom_call.1} parent=0
    _
  %s10 = ssub.s32 1, %s8
  %s11 = scalar_select 0, %s10, %s8
  %12 = sst [smem:[#allocation2]] %s6
  $region1: #{tpu_custom_call.1} parent=0
    #allocation3 [shape = 'u8[8192]{0}', space=vmem, size = 0x2000, scoped, tag = 'input window, operand 0, single buffered']
    #allocation4 [shape = 's32[1]{0}', space=sflag, size = 0x4, scoped, tag = 'scoped memory for tpu_custom_call.1']
    #allocation5 [shape = 'u8[65536]{0}', space=vmem, size = 0x10000, scoped, tag = 'input window, operand 1, single buffered']
    #allocation6 [shape = 's32[1]{0}', space=sflag, size = 0x4, scoped, tag = 'scoped memory for tpu_custom_call.1']
    #allocation7 [shape = 'u8[65536]{0}', space=vmem, size = 0x10000, scoped, tag = 'input window, operand 3, single buffered']
    %13 = vsyncpa [#allocation4], 0
    %14 = vsyncpa [#allocation6], 0
    // Predicated region
    $region2: #{tpu_custom_call.1} parent=1 // pred_check
      _
    $region3: #{tpu_custom_call.1} parent=1 // pred_check_branch
      %16 = sbr.rel (0) target = $region5
    $region4: #{tpu_custom_call.1} parent=1 // pred_region
      %18 = vsyncadd [#allocation4], 0
      %s19 = sshll.u32 %s0, 4
      %s20 = int_to_ptr.hbm [resolvable:$true] %s19
      %s21 = sshll.u32 [#allocation3], 4
      %s22 = int_to_ptr.vmem [resolvable:$true] %s21
      %27 = dma.hbm_to_vmem [thread:$0]  %s20, 256, %s22, [#allocation4], 128, 128, 8
    $region5: #{tpu_custom_call.1} parent=1 // pred_fallthru
      _
    // Predicated region
    $region6: #{tpu_custom_call.1} parent=1 // pred_check
      _
    $region7: #{tpu_custom_call.1} parent=1 // pred_check_branch
      %29 = sbr.rel (0) target = $region9
    $region8: #{tpu_custom_call.1} parent=1 // pred_region
      %31 = vsyncadd [#allocation6], 0
      %s32 = sshll.u32 %s1, 4
      %s33 = int_to_ptr.hbm [resolvable:$true] %s32
      %s34 = sshll.u32 [#allocation5], 4
      %s35 = int_to_ptr.vmem [resolvable:$true] %s34
      %40 = dma.hbm_to_vmem [thread:$0]  %s33, 2048, %s35, [#allocation6], 128, 128, 8
    $region9: #{tpu_custom_call.1} parent=1 // pred_fallthru
      _
    // Predicated region
    $region10: #{tpu_custom_call.1} parent=1 // pred_check
      _
    $region11: #{tpu_custom_call.1} parent=1 // pred_check_branch
      %42 = sbr.rel (0) target = $region13
    $region12: #{tpu_custom_call.1} parent=1 // pred_region
      _
    $region13: #{tpu_custom_call.1} parent=1 // pred_fallthru
      _
    // Predicated region
    $region14: #{tpu_custom_call.1} parent=1 // pred_check
      _
    $region15: #{tpu_custom_call.1} parent=1 // pred_check_branch
      %44 = sbr.rel (0) target = $region17
    $region16: #{tpu_custom_call.1} parent=1 // pred_region
      %46 = vsyncadd [#allocation6], 0
      %s47 = sshll.u32 %s3, 4
      %s48 = int_to_ptr.hbm [resolvable:$true] %s47
      %s49 = sshll.u32 [#allocation7], 4
      %s50 = int_to_ptr.vmem [resolvable:$true] %s49
      %55 = dma.hbm_to_vmem [thread:$0]  %s48, 2048, %s50, [#allocation6], 128, 128, 8
    $region17: #{tpu_custom_call.1} parent=1 // pred_fallthru
      _
    // Predicated region
    $region18: #{tpu_custom_call.1} parent=1 // pred_check
      _
    $region19: #{tpu_custom_call.1} parent=1 // pred_check_branch
      %57 = sbr.rel (0) target = $region21
    $region20: #{tpu_custom_call.1} parent=1 // pred_region
      _
    $region21: #{tpu_custom_call.1} parent=1 // pred_fallthru
      _
    // Predicated region
    $region22: #{tpu_custom_call.1} parent=1 // pred_check
      _
    $region23: #{tpu_custom_call.1} parent=1 // pred_check_branch
      %59 = sbr.rel (0) target = $region25
    $region24: #{tpu_custom_call.1} parent=1 // pred_region
      _
    $region25: #{tpu_custom_call.1} parent=1 // pred_fallthru
      _
    // Predicated region
    $region26: #{tpu_custom_call.1} parent=1 // pred_check
      _
    $region27: #{tpu_custom_call.1} parent=1 // pred_check_branch
      %61 = sbr.rel (0) target = $region29
    $region28: #{tpu_custom_call.1} parent=1 // pred_region
      _
    $region29: #{tpu_custom_call.1} parent=1 // pred_fallthru
      _
    // Predicated region
    $region30: #{tpu_custom_call.1} parent=1 // pred_check
      _
    $region31: #{tpu_custom_call.1} parent=1 // pred_check_branch
      %63 = sbr.rel (0) target = $region33
    $region32: #{tpu_custom_call.1} parent=1 // pred_region
      %65 = dma.done [#allocation4], 256
    $region33: #{tpu_custom_call.1} parent=1 // pred_fallthru
      _
    // Predicated region
    $region34: #{tpu_custom_call.1} parent=1 // pred_check
      _
    $region35: #{tpu_custom_call.1} parent=1 // pred_check_branch
      %67 = sbr.rel (0) target = $region37
    $region36: #{tpu_custom_call.1} parent=1 // pred_region
      %69 = dma.done [#allocation6], 2048
    $region37: #{tpu_custom_call.1} parent=1 // pred_fallthru
      _
    // Predicated region
    $region38: #{tpu_custom_call.1} parent=1 // pred_check
      _
    $region39: #{tpu_custom_call.1} parent=1 // pred_check_branch
      %71 = sbr.rel (0) target = $region41
    $region40: #{tpu_custom_call.1} parent=1 // pred_region
      %73 = dma.done [#allocation6], 2048
    $region41: #{tpu_custom_call.1} parent=1 // pred_fallthru
      _
    %v74 = vld [vmem:[#allocation3] sm:$0xff]
    %v75 = vld [vmem:[#allocation3 + $0x8] sm:$0xff]
    %v76 = vld [vmem:[#allocation5] sm:$0xff]
    %v77 = vld [vmem:[#allocation5 + $0x8] sm:$0xff]
    %v78 = vld [vmem:[#allocation5 + $0x10] sm:$0xff]
    %v79 = vld [vmem:[#allocation5 + $0x18] sm:$0xff]
    %v80 = vld [vmem:[#allocation5 + $0x20] sm:$0xff]
    %v81 = vld [vmem:[#allocation5 + $0x28] sm:$0xff]
    %v82 = vld [vmem:[#allocation5 + $0x30] sm:$0xff]
    %v83 = vld [vmem:[#allocation5 + $0x38] sm:$0xff]
    %v84 = vld [vmem:[#allocation5 + $0x40] sm:$0xff]
    %v85 = vld [vmem:[#allocation5 + $0x48] sm:$0xff]
    %v86 = vld [vmem:[#allocation5 + $0x50] sm:$0xff]
    %v87 = vld [vmem:[#allocation5 + $0x58] sm:$0xff]
    %v88 = vld [vmem:[#allocation5 + $0x60] sm:$0xff]
    %v89 = vld [vmem:[#allocation5 + $0x68] sm:$0xff]
    %v90 = vld [vmem:[#allocation5 + $0x70] sm:$0xff]
    %v91 = vld [vmem:[#allocation5 + $0x78] sm:$0xff]
    %v92 = vld [vmem:[%s2] sm:$0x1]
    %v94 = vperm.slane %v92, 0
    %96 = vmatpush.msra.mxu0 %v91
    %97 = vmatpush.msra.mxu0 %v90
    %98 = vmatpush.msra.mxu0 %v89
    %99 = vmatpush.msra.mxu0 %v88
    %100 = vmatpush.msra.mxu0 %v87
    %101 = vmatpush.msra.mxu0 %v86
    %102 = vmatpush.msra.mxu0 %v85
    %103 = vmatpush.msra.mxu0 %v84
    %104 = vmatpush.msra.mxu0 %v83
    %105 = vmatpush.msra.mxu0 %v82
    %106 = vmatpush.msra.mxu0 %v81
    %107 = vmatpush.msra.mxu0 %v80
    %108 = vmatpush.msra.mxu0 %v79
    %109 = vmatpush.msra.mxu0 %v78
    %110 = vmatpush.msra.mxu0 %v77
    %111 = vmatpush.msra.mxu0 %v76
    %112 = vmatmul.f32.gmra.mxu0 %v74
    %v113 = vpop.f32.mrf.mxu0
    %v114 = vadd.f32 %v94, %v113
    %115 = vmatmul.f32.gmra.mxu0 %v75
    %v116 = vpop.f32.mrf.mxu0
    %v117 = vadd.f32 %v94, %v116
    %118 = vdwg.mxu0
    %v119 = vmax.f32 %v114, 0.0
    %v120 = vmax.f32 %v117, 0.0
    %v121 = vld [vmem:[#allocation7] sm:$0xff]
    %v122 = vld [vmem:[#allocation7 + $0x8] sm:$0xff]
    %v123 = vld [vmem:[#allocation7 + $0x10] sm:$0xff]
    %v124 = vld [vmem:[#allocation7 + $0x18] sm:$0xff]
    %v125 = vld [vmem:[#allocation7 + $0x20] sm:$0xff]
    %v126 = vld [vmem:[#allocation7 + $0x28] sm:$0xff]
    %v127 = vld [vmem:[#allocation7 + $0x30] sm:$0xff]
    %v128 = vld [vmem:[#allocation7 + $0x38] sm:$0xff]
    %v129 = vld [vmem:[#allocation7 + $0x40] sm:$0xff]
    %v130 = vld [vmem:[#allocation7 + $0x48] sm:$0xff]
    %v131 = vld [vmem:[#allocation7 + $0x50] sm:$0xff]
    %v132 = vld [vmem:[#allocation7 + $0x58] sm:$0xff]
    %v133 = vld [vmem:[#allocation7 + $0x60] sm:$0xff]
    %v134 = vld [vmem:[#allocation7 + $0x68] sm:$0xff]
    %v135 = vld [vmem:[#allocation7 + $0x70] sm:$0xff]
    %v136 = vld [vmem:[#allocation7 + $0x78] sm:$0xff]
    %v137 = vld [vmem:[%s4] sm:$0x1]
    %v139 = vperm.slane %v137, 0
    %141 = vmatpush.msra.mxu0 %v136
    %142 = vmatpush.msra.mxu0 %v135
    %143 = vmatpush.msra.mxu0 %v134
    %144 = vmatpush.msra.mxu0 %v133
    %145 = vmatpush.msra.mxu0 %v132
    %146 = vmatpush.msra.mxu0 %v131
    %147 = vmatpush.msra.mxu0 %v130
    %148 = vmatpush.msra.mxu0 %v129
    %149 = vmatpush.msra.mxu0 %v128
    %150 = vmatpush.msra.mxu0 %v127
    %151 = vmatpush.msra.mxu0 %v126
    %152 = vmatpush.msra.mxu0 %v125
    %153 = vmatpush.msra.mxu0 %v124
    %154 = vmatpush.msra.mxu0 %v123
    %155 = vmatpush.msra.mxu0 %v122
    %156 = vmatpush.msra.mxu0 %v121
    %157 = vmatmul.f32.gmra.mxu0 %v119
    %v158 = vpop.f32.mrf.mxu0
    %v159 = vadd.f32 %v139, %v158
    %160 = vmatmul.f32.gmra.mxu0 %v120
    %v161 = vpop.f32.mrf.mxu0
    %v162 = vadd.f32 %v139, %v161
    %163 = vdwg.mxu0
    %v164 = vmax.f32 %v159, 0.0
    %v165 = vmax.f32 %v162, 0.0
    %v166 = vld [vmem:[%s5] sm:$0x1]
    %v168 = vperm.slane %v166, 0
    %v170 = vmul.f32 %v164, %v168
    %v171 = vmul.f32 %v165, %v168
    %172 = vadd.xlane.f32.xlu0 %v170
    %v173 = vpop.xlane.xlu0 %172
    %174 = vadd.xlane.f32.xlu0 %v171
    %v175 = vpop.xlane.xlu0 %174
    %s176 = sld [smem:[#allocation2]]
    %v177 = vstv %s176
    %v178 = vadd.f32 %v173, %v177
    %v179 = vadd.f32 %v175, %v177
    %vm180 = vcmask 7168
    %181 = vst.msk [vmem:[%s7] sm:$0xff] %vm180, %v178
    %182 = vst.msk [vmem:[%s7 + $0x8] sm:$0xff] %vm180, %v179
    // Predicated region
    $region42: #{tpu_custom_call.1} parent=1 // pred_check
      _
    $region43: #{tpu_custom_call.1} parent=1 // pred_check_branch
      %184 = sbr.rel (0) target = $region45
    $region44: #{tpu_custom_call.1} parent=1 // pred_region
      _
    $region45: #{tpu_custom_call.1} parent=1 // pred_fallthru
      _
    // Predicated region
    $region46: #{tpu_custom_call.1} parent=1 // pred_check
      _
    $region47: #{tpu_custom_call.1} parent=1 // pred_check_branch
      %186 = sbr.rel (0) target = $region49
    $region48: #{tpu_custom_call.1} parent=1 // pred_region
      _
    $region49: #{tpu_custom_call.1} parent=1 // pred_fallthru
      _
    %187 = vsyncpa [#allocation4], 1
    %188 = vsyncpa [#allocation6], 1

</llo_original>
